<compile_context>
chip_gen: v5e
topology: v5e:2x2
jax: 0.10.0
libtpu: 0.0.40
codegen_flags: <defaults>
</compile_context>

<pallas_src>
import jax
import jax.numpy as jnp
from jax.experimental import pallas as pl
from jax.experimental.pallas import tpu as pltpu

# Per-channel constants from ScalingLayer.__init__ (compile-time Python floats).
_SHIFT = (-0.030, -0.088, -0.188)
_SCALE = (0.458, 0.448, 0.450)
_INV_SCALE = tuple(1.0 / s for s in _SCALE)

_LANE = 128
_TARGET_BYTES = 1536 * 1024      # ~1.5 MiB per buffer: >= ~85% of HBM roofline
_MAX_BYTES = 2 * _TARGET_BYTES   # cap for "take the full row" tiles (~3 MiB)
_MIN_BYTES = 512 * 1024          # floor when splitting the grid for megacore
_MIN_STEPS = 8                   # aim for >= 4 steps per TensorCore on v7x


def _choose_blocks(n_rows, hw, itemsize):
    """Pick (block_rows, block_hw) for the (n_rows, hw) view.

    Legality: each of the last two block dims is a multiple of (8, 128) or
    equals the full array dim, so partial boundary blocks are simply masked.
    """
    row_bytes = hw * itemsize

    # Row blocking: a multiple of 8, or all rows.
    if n_rows <= 8:
        block_rows = n_rows
    else:
        desired = max(1, _TARGET_BYTES // max(row_bytes, 1))
        if desired >= n_rows:
            block_rows = n_rows
        else:
            block_rows = min((n_rows // 8) * 8, max(8, (desired // 8) * 8))

    # Lane blocking: keep full rows (fully contiguous HBM DMA, valid for any
    # h*w) unless that overshoots the VMEM budget; then take a multiple-of-128
    # slice sized so the tile lands near the target.
    if hw <= _LANE or block_rows * row_bytes <= _MAX_BYTES:
        block_hw = hw
    else:
        per_row = max(_LANE,
                      (_TARGET_BYTES // (block_rows * itemsize) // _LANE) * _LANE)
        block_hw = min(per_row, (hw // _LANE) * _LANE)

    # Megacore balance: grow the grid toward _MIN_STEPS steps while each
    # buffer stays >= _MIN_BYTES (still near the HBM-roofline plateau).
    def n_steps(br, bh):
        return pl.cdiv(n_rows, br) * pl.cdiv(hw, bh)

    while n_steps(block_rows, block_hw) < _MIN_STEPS:
        new_rows = max(8, (block_rows // 2 // 8) * 8)
        if new_rows < block_rows and new_rows * block_hw * itemsize >= _MIN_BYTES:
            block_rows = new_rows
            continue
        new_hw = max(_LANE, (block_hw // 2 // _LANE) * _LANE)
        if new_hw < block_hw and block_rows * new_hw * itemsize >= _MIN_BYTES:
            block_hw = new_hw
            continue
        break

    return block_rows, block_hw


def _scaling_kernel(shift_ref, inv_scale_ref, x_ref, o_ref):
    # x_ref / o_ref: (block_rows, block_hw) tile of the (n*3, h*w) view.
    # shift_ref / inv_scale_ref: (block_rows, 1) per-row channel constants.
    x = x_ref[...].astype(jnp.float32)
    o_ref[...] = ((x - shift_ref[...]) * inv_scale_ref[...]).astype(o_ref.dtype)


def scaling_layer(inp):
    """inp: NCHW array with C == 3. Returns (inp - shift) / scale in inp.dtype."""
    n, c, h, w = inp.shape
    assert c == 3, "ScalingLayer is defined for 3-channel (RGB) inputs"
    hw = h * w
    n_rows = n * c
    itemsize = jnp.dtype(inp.dtype).itemsize

    x = inp.reshape(n_rows, hw)  # free (contiguous) 2-D view
    block_rows, block_hw = _choose_blocks(n_rows, hw, itemsize)
    grid = (pl.cdiv(n_rows, block_rows), pl.cdiv(hw, block_hw))

    # Per-row channel constants (row r of the 2-D view has channel r % 3).
    shift_col = jnp.tile(jnp.asarray(_SHIFT, jnp.float32), n).reshape(n_rows, 1)
    inv_col = jnp.tile(jnp.asarray(_INV_SCALE, jnp.float32), n).reshape(n_rows, 1)

    out = pl.pallas_call(
        _scaling_kernel,
        out_shape=jax.ShapeDtypeStruct((n_rows, hw), inp.dtype),
        grid_spec=pltpu.PrefetchScalarGridSpec(
            num_scalar_prefetch=0,
            grid=grid,
            in_specs=[
                pl.BlockSpec((block_rows, 1), lambda i, j: (i, 0)),
                pl.BlockSpec((block_rows, 1), lambda i, j: (i, 0)),
                pl.BlockSpec((block_rows, block_hw), lambda i, j: (i, j)),
            ],
            out_specs=pl.BlockSpec((block_rows, block_hw), lambda i, j: (i, j)),
        ),
        compiler_params=pltpu.CompilerParams(
            dimension_semantics=("parallel", "parallel"),
        ),
    )(shift_col, inv_col, x)

    return out.reshape(n, c, h, w)


if __name__ == "__main__":
    key = jax.random.PRNGKey(0)

    # Main check: small NCHW input, spatial size lane-aligned (16*16 = 256).
    x = jax.random.normal(key, (2, 3, 16, 16), dtype=jnp.float32)
    y = jax.block_until_ready(scaling_layer(x))

    shift = jnp.array(_SHIFT, dtype=jnp.float32)[None, :, None, None]
    scale = jnp.array(_SCALE, dtype=jnp.float32)[None, :, None, None]
    y_ref = (x - shift) / scale
    assert y.shape == x.shape and y.dtype == x.dtype
    assert jnp.allclose(y, y_ref, atol=1e-6, rtol=1e-5)

    # Secondary check: non-lane-aligned spatial size (7*9 = 63) exercises the
    # pad-free masked-tail path.
    x2 = jax.random.normal(jax.random.PRNGKey(1), (1, 3, 7, 9), dtype=jnp.float32)
    y2 = jax.block_until_ready(scaling_layer(x2))
    y2_ref = (x2 - shift) / scale
    assert jnp.allclose(y2, y2_ref, atol=1e-6, rtol=1e-5)

    print("KERNEL_OK")
</pallas_src>

<mosaic_0001>
module attributes {stable_mosaic.version = 11 : i64} {
  func.func @_scaling_kernel(%arg0: i32, %arg1: i32, %arg2: memref<6x1xf32, #tpu.memory_space<vmem>>, %arg3: memref<6x1xf32, #tpu.memory_space<vmem>>, %arg4: memref<6x256xf32, #tpu.memory_space<vmem>>, %arg5: memref<6x256xf32, #tpu.memory_space<vmem>>) attributes {dimension_semantics = [#tpu.dimension_semantics<parallel>, #tpu.dimension_semantics<parallel>], iteration_bounds = array<i64: 1, 1>, scalar_prefetch = 0 : i64, scratch_operands = 0 : i64, tpu.core_type = #tpu.core_type<tc>, window_params = [{transform_indices = @transform_0, window_bounds = array<i64: 6, 1>}, {transform_indices = @transform_1, window_bounds = array<i64: 6, 1>}, {transform_indices = @transform_2, window_bounds = array<i64: 6, 256>}, {transform_indices = @transform_3, window_bounds = array<i64: 6, 256>}]} {
    %c0 = arith.constant 0 : index
    %c0_0 = arith.constant 0 : index
    %0 = vector.load %arg4[%c0, %c0_0] : memref<6x256xf32, #tpu.memory_space<vmem>>, vector<6x256xf32>
    %c0_1 = arith.constant 0 : index
    %c0_2 = arith.constant 0 : index
    %1 = vector.load %arg2[%c0_1, %c0_2] : memref<6x1xf32, #tpu.memory_space<vmem>>, vector<6x1xf32>
    %2 = vector.broadcast %1 : vector<6x1xf32> to vector<6x256xf32>
    %3 = arith.subf %0, %2 : vector<6x256xf32>
    %c0_3 = arith.constant 0 : index
    %c0_4 = arith.constant 0 : index
    %4 = vector.load %arg3[%c0_3, %c0_4] : memref<6x1xf32, #tpu.memory_space<vmem>>, vector<6x1xf32>
    %5 = vector.broadcast %4 : vector<6x1xf32> to vector<6x256xf32>
    %6 = arith.mulf %3, %5 : vector<6x256xf32>
    %c0_5 = arith.constant 0 : index
    %c0_6 = arith.constant 0 : index
    %7 = vector.load %arg5[%c0_5, %c0_6] : memref<6x256xf32, #tpu.memory_space<vmem>>, vector<6x256xf32>
    tpu.vector_store %arg5[%c0_5, %c0_6], %6 {strides = array<i32>} : memref<6x256xf32, #tpu.memory_space<vmem>>, vector<6x256xf32>,
    return
  }
  func.func @transform_0(%arg0: i32, %arg1: i32) -> (i32, i32) {
    %c0_i32 = arith.constant 0 : i32
    %c0_i32_0 = arith.constant 0 : i32
    return %arg0, %c0_i32 : i32, i32
  }
  func.func @transform_1(%arg0: i32, %arg1: i32) -> (i32, i32) {
    %c0_i32 = arith.constant 0 : i32
    %c0_i32_0 = arith.constant 0 : i32
    return %arg0, %c0_i32 : i32, i32
  }
  func.func @transform_2(%arg0: i32, %arg1: i32) -> (i32, i32) {
    %c0_i32 = arith.constant 0 : i32
    return %arg0, %arg1 : i32, i32
  }
  func.func @transform_3(%arg0: i32, %arg1: i32) -> (i32, i32) {
    %c0_i32 = arith.constant 0 : i32
    return %arg0, %arg1 : i32, i32
  }
}

</mosaic_0001>

<llo_original>
// kernel: tpu_custom_call.1
$region0: #{tpu_custom_call.1}
  #allocation0 [shape = 'u32[]', space=smem, size = 0x4, offset = 0x4, fixed_abs, tag = 'smem constant byte address 0x4 - core index']
  #allocation1 [shape = 'u32[72,128]{1,0:T(1,128)}', space=vmem, size = 0x9000, scoped, tag = 'internal scratch']
  %s0 = inlined_call_operand.vmem [shape: f32[6,1], index: 0, kind: input, shape index: {}]
  %s1 = inlined_call_operand.vmem [shape: f32[6,1], index: 1, kind: input, shape index: {}]
  %s2 = inlined_call_operand.vmem [shape: f32[6,256], index: 2, kind: input, shape index: {}]
  %s3 = inlined_call_operand.hbm [shape: f32[6,256], index: 3, kind: output, shape index: {}]
  %s4 = sld [smem:[#allocation0]]
  $region22: #{tpu_custom_call.1} parent=0
    _
  %s6 = ssub.s32 1, %s4
  %s7 = scalar_select 0, %s6, %s4
  $region1: #{tpu_custom_call.1} parent=0
    #allocation2 [shape = 'u8[8192]{0}', space=vmem, size = 0x2000, scoped, tag = 'output window, operand 0, single buffered']
    #allocation3 [shape = 's32[1]{0}', space=sflag, size = 0x4, scoped, tag = 'scoped memory for tpu_custom_call.1']
    %8 = vsyncpa [#allocation3], 0
    // Predicated region
    $region2: #{tpu_custom_call.1} parent=1 // pred_check
      _
    $region3: #{tpu_custom_call.1} parent=1 // pred_check_branch
      %10 = sbr.rel (0) target = $region5
    $region4: #{tpu_custom_call.1} parent=1 // pred_region
      _
    $region5: #{tpu_custom_call.1} parent=1 // pred_fallthru
      _
    // Predicated region
    $region6: #{tpu_custom_call.1} parent=1 // pred_check
      _
    $region7: #{tpu_custom_call.1} parent=1 // pred_check_branch
      %12 = sbr.rel (0) target = $region9
    $region8: #{tpu_custom_call.1} parent=1 // pred_region
      _
    $region9: #{tpu_custom_call.1} parent=1 // pred_fallthru
      _
    // Predicated region
    $region10: #{tpu_custom_call.1} parent=1 // pred_check
      _
    $region11: #{tpu_custom_call.1} parent=1 // pred_check_branch
      %14 = sbr.rel (0) target = $region13
    $region12: #{tpu_custom_call.1} parent=1 // pred_region
      _
    $region13: #{tpu_custom_call.1} parent=1 // pred_fallthru
      _
    %v15 = vld [vmem:[%s2] sm:$0x3f]
    %v16 = vld [vmem:[%s2 + $0x8] sm:$0x3f]
    %v17 = vld [vmem:[%s0] sm:$0x3f]
    %19 = vset.pattern.permute.xlu0 0
    %20 = vperm.xlu0 %19, %v17
    %v21 = vpop.permute.xlu0 %20
    %v23 = vsub.f32 %v15, %v21
    %v24 = vsub.f32 %v16, %v21
    %v25 = vld [vmem:[%s1] sm:$0x3f]
    %27 = vset.pattern.permute.xlu0 0
    %28 = vperm.xlu0 %27, %v25
    %v29 = vpop.permute.xlu0 %28
    %v31 = vmul.f32 %v23, %v29
    %v32 = vmul.f32 %v24, %v29
    %33 = vst [vmem:[#allocation2] sm:$0x3f] %v31
    %34 = vst [vmem:[#allocation2 + $0x8] sm:$0x3f] %v32
    // Predicated region
    $region14: #{tpu_custom_call.1} parent=1 // pred_check
      _
    $region15: #{tpu_custom_call.1} parent=1 // pred_check_branch
      %36 = sbr.rel (0) target = $region17
    $region16: #{tpu_custom_call.1} parent=1 // pred_region
      %38 = vsyncadd [#allocation3], 0
      %s40 = sshll.u32 [#allocation2], 4
      %s41 = int_to_ptr.vmem [resolvable:$true] %s40
      %s42 = sshll.u32 %s3, 4
      %s43 = int_to_ptr.hbm [resolvable:$true] %s42
      %45 = dma.vmem_to_hbm [thread:$0]  %s41, 256, %s43, [#allocation3]
    $region17: #{tpu_custom_call.1} parent=1 // pred_fallthru
      _
    // Predicated region
    $region18: #{tpu_custom_call.1} parent=1 // pred_check
      _
    $region19: #{tpu_custom_call.1} parent=1 // pred_check_branch
      %47 = sbr.rel (0) target = $region21
    $region20: #{tpu_custom_call.1} parent=1 // pred_region
      %49 = dma.done [#allocation3], 256
    $region21: #{tpu_custom_call.1} parent=1 // pred_fallthru
      _
    %50 = vsyncpa [#allocation3], 1

</llo_original>
